<compile_context>
chip_gen: v6e
topology: v6e:2x2x1
jax: 0.10.0
libtpu: 0.0.40
codegen_flags: <defaults>
</compile_context>

<pallas_src>
import functools

import jax
import jax.numpy as jnp
from jax.experimental import pallas as pl
from jax.experimental.pallas import tpu as pltpu


def _channel_attention_kernel(x_ref, w1_ref, w2_ref, o_ref, sum_acc, max_acc,
                              *, hw, hw_tile, needs_mask):
    # x_ref  : [TN, C, HW_TILE]  streamed spatial tile
    # w1_ref : [C, Ch]           conv1 weight (transposed), VMEM-resident
    # w2_ref : [Ch, C]           conv2 weight (transposed), VMEM-resident
    # o_ref  : [TN, C]           written only on the last HW step
    # sum_acc, max_acc : [TN, C] f32 VMEM scratch accumulators
    s = pl.program_id(1)
    last = pl.num_programs(1) - 1

    @pl.when(s == 0)
    def _init():
        sum_acc[...] = jnp.zeros_like(sum_acc)
        max_acc[...] = jnp.full_like(max_acc, -jnp.inf)

    x = x_ref[...].astype(jnp.float32)              # upcast (bf16 inputs OK)

    if needs_mask:
        # Only the last spatial tile can be partial; keep full tiles on the
        # branch-free fast path and mask only in the final step.
        @pl.when(s != last)
        def _accum_full():
            sum_acc[...] = sum_acc[...] + jnp.sum(x, axis=-1)
            max_acc[...] = jnp.maximum(max_acc[...], jnp.max(x, axis=-1))

        @pl.when(s == last)
        def _accum_partial():
            lane = jax.lax.broadcasted_iota(jnp.int32, x.shape, 2) + s * hw_tile
            valid = lane < hw
            sum_acc[...] = sum_acc[...] + jnp.sum(
                jnp.where(valid, x, 0.0), axis=-1)
            max_acc[...] = jnp.maximum(
                max_acc[...], jnp.max(jnp.where(valid, x, -jnp.inf), axis=-1))
    else:
        sum_acc[...] = sum_acc[...] + jnp.sum(x, axis=-1)
        max_acc[...] = jnp.maximum(max_acc[...], jnp.max(x, axis=-1))

    @pl.when(s == last)
    def _finalize():
        w1 = w1_ref[...]                            # [C, Ch]
        w2 = w2_ref[...]                            # [Ch, C]
        p_avg = sum_acc[...] * (1.0 / hw)           # AdaptiveAvgPool2d(1)
        p_max = max_acc[...]                        # AdaptiveMaxPool2d(1)

        def mlp(p):
            h = jnp.maximum(
                jnp.dot(p, w1, preferred_element_type=jnp.float32), 0.0)
            return jnp.dot(h, w2, preferred_element_type=jnp.float32)

        z = mlp(p_avg) + mlp(p_max)
        o_ref[...] = jax.nn.sigmoid(z).astype(o_ref.dtype)


def _pick_batch_tile(n):
    # Output block is (TN, C): TN must be a multiple of 8 or the full batch.
    # Prefer 8 so the batch grid axis can shard across TensorCores (v7x).
    if n > 8 and n % 8 == 0:
        return 8
    return n


def _pick_hw_tile(tn, c, hw, itemsize, budget_bytes):
    # Budget covers the double-buffered x tile (weights/scratch are tiny).
    if hw <= 128:
        return hw                                  # full spatial dim: always legal
    per_lane = 2 * tn * c * itemsize               # bytes per lane (x2 buffers)
    max_tile = max(128, (budget_bytes // per_lane) // 128 * 128)
    return int(min(max_tile, (hw // 128) * 128))


def channel_attention(x, w1, w2, *, hw_tile=None, batch_tile=None,
                      vmem_limit_bytes=32 * 1024 * 1024):
    """x: [N, C, H, W] float; w1: [Ch, C] (conv1 weight squeezed);
       w2: [C, Ch] (conv2 weight squeezed). Returns [N, C, 1, 1] float32."""
    n, c, h, w = x.shape
    hw = h * w
    ch = w1.shape[0]
    assert w1.shape == (ch, c) and w2.shape == (c, ch)

    x_flat = x.reshape(n, c, hw)
    w1_t = jnp.transpose(w1).astype(jnp.float32)   # [C, Ch]
    w2_t = jnp.transpose(w2).astype(jnp.float32)   # [Ch, C]

    tn = batch_tile if batch_tile is not None else _pick_batch_tile(n)
    if hw_tile is None:
        hw_tile = _pick_hw_tile(tn, c, hw, x_flat.dtype.itemsize,
                                budget_bytes=(3 * vmem_limit_bytes) // 4)
    assert hw_tile == hw or hw_tile % 128 == 0, hw_tile

    nb = pl.cdiv(n, tn)
    ns = pl.cdiv(hw, hw_tile)
    needs_mask = (hw % hw_tile) != 0

    kernel = functools.partial(_channel_attention_kernel,
                               hw=hw, hw_tile=hw_tile, needs_mask=needs_mask)

    out = pl.pallas_call(
        kernel,
        out_shape=jax.ShapeDtypeStruct((n, c), jnp.float32),
        grid_spec=pltpu.PrefetchScalarGridSpec(
            num_scalar_prefetch=0,
            grid=(nb, ns),
            in_specs=[
                pl.BlockSpec((tn, c, hw_tile), lambda b, s: (b, 0, s)),
                pl.BlockSpec((c, ch), lambda b, s: (0, 0)),   # weights resident
                pl.BlockSpec((ch, c), lambda b, s: (0, 0)),
            ],
            out_specs=pl.BlockSpec((tn, c), lambda b, s: (b, 0)),
            scratch_shapes=[
                pltpu.VMEM((tn, c), jnp.float32),   # running sum
                pltpu.VMEM((tn, c), jnp.float32),   # running max
            ],
        ),
        compiler_params=pltpu.CompilerParams(
            dimension_semantics=("parallel", "arbitrary"),
            vmem_limit_bytes=vmem_limit_bytes,
        ),
    )(x_flat, w1_t, w2_t)

    return out.reshape(n, c, 1, 1)


def reference(x, w1, w2):
    # Pure-JAX reference mirroring the PyTorch module.
    x_avg = jnp.mean(x, axis=(2, 3))               # [N, C]
    x_max = jnp.max(x, axis=(2, 3))                # [N, C]

    def mlp(p):
        h = jnp.maximum(p @ w1.T, 0.0)             # Conv2d(C->Ch,1x1) + ReLU
        return h @ w2.T                            # Conv2d(Ch->C,1x1)

    z = mlp(x_avg) + mlp(x_max)
    return jax.nn.sigmoid(z).reshape(*z.shape, 1, 1)


def _make_weights(key, channels, ratio=16):
    hidden = channels // ratio if channels >= ratio else 1
    k1, k2 = jax.random.split(key)
    # Conv2d 1x1 weights (bias=False), squeezed:
    #   conv1.weight: [hidden, channels, 1, 1] -> [hidden, channels]
    #   conv2.weight: [channels, hidden, 1, 1] -> [channels, hidden]
    w1 = jax.random.normal(k1, (hidden, channels), dtype=jnp.float32) * 0.1
    w2 = jax.random.normal(k2, (channels, hidden), dtype=jnp.float32) * 0.1
    return w1, w2


if __name__ == "__main__":
    key = jax.random.PRNGKey(0)
    kx1, kx2, kw1, kw2 = jax.random.split(key, 4)

    # Test 1: channels=32, ratio=16 -> hidden=2; HW=256 with hw_tile=128 gives
    # 2 spatial grid steps, exercising the running sum/max accumulators and
    # the @pl.when finalize path.
    c1 = 32
    w1a, w2a = _make_weights(kw1, c1, ratio=16)
    x1 = jax.random.normal(kx1, (2, c1, 16, 16), dtype=jnp.float32)
    out1 = jax.block_until_ready(channel_attention(x1, w1a, w2a, hw_tile=128))
    ref1 = reference(x1, w1a, w2a)
    assert out1.shape == (2, c1, 1, 1), out1.shape
    assert jnp.allclose(out1, ref1, atol=1e-5, rtol=1e-5), (
        float(jnp.max(jnp.abs(out1 - ref1))))

    # Test 2: channels=4 < ratio -> hidden=1; HW=144 (not a multiple of 128)
    # exercises the masked remainder tile (0 for the sum, -inf for the max).
    c2 = 4
    w1b, w2b = _make_weights(kw2, c2, ratio=16)
    x2 = jax.random.normal(kx2, (2, c2, 12, 12), dtype=jnp.float32)
    out2 = jax.block_until_ready(channel_attention(x2, w1b, w2b, hw_tile=128))
    ref2 = reference(x2, w1b, w2b)
    assert out2.shape == (2, c2, 1, 1), out2.shape
    assert jnp.allclose(out2, ref2, atol=1e-5, rtol=1e-5), (
        float(jnp.max(jnp.abs(out2 - ref2))))

    # Test 3: bf16 activations (kernel upcasts to f32 internally).
    x3 = x1.astype(jnp.bfloat16)
    out3 = jax.block_until_ready(channel_attention(x3, w1a, w2a))
    ref3 = reference(x3.astype(jnp.float32), w1a, w2a)
    assert jnp.allclose(out3, ref3, atol=2e-2, rtol=2e-2), (
        float(jnp.max(jnp.abs(out3 - ref3))))

    print("KERNEL_OK")
</pallas_src>

<mosaic_0001>
module attributes {stable_mosaic.version = 11 : i64} {
  func.func @_channel_attention_kernel(%arg0: i32, %arg1: i32, %arg2: memref<2x32x128xf32, #tpu.memory_space<vmem>>, %arg3: memref<32x2xf32, #tpu.memory_space<vmem>>, %arg4: memref<2x32xf32, #tpu.memory_space<vmem>>, %arg5: memref<2x32xf32, #tpu.memory_space<vmem>>, %arg6: memref<2x32xf32, #tpu.memory_space<vmem>>, %arg7: memref<2x32xf32, #tpu.memory_space<vmem>>) attributes {dimension_semantics = [#tpu.dimension_semantics<parallel>, #tpu.dimension_semantics<arbitrary>], iteration_bounds = array<i64: 1, 2>, scalar_prefetch = 0 : i64, scratch_operands = 2 : i64, tpu.core_type = #tpu.core_type<tc>, window_params = [{transform_indices = @transform_0, window_bounds = array<i64: 2, 32, 128>}, {pipeline_mode = #tpu.pipeline_mode<synchronous>, transform_indices = @transform_1, window_bounds = array<i64: 32, 2>}, {pipeline_mode = #tpu.pipeline_mode<synchronous>, transform_indices = @transform_2, window_bounds = array<i64: 2, 32>}, {transform_indices = @transform_3, window_bounds = array<i64: 2, 32>}]} {
    %c0_i32 = arith.constant 0 : i32
    %0 = arith.cmpi eq, %arg1, %c0_i32 : i32
    %1 = arith.extui %0 : i1 to i32
    %c0_i32_0 = arith.constant 0 : i32
    %2 = arith.cmpi ne, %1, %c0_i32_0 : i32
    scf.if %2 {
      %cst_13 = arith.constant 0.000000e+00 : f32
      %15 = vector.broadcast %cst_13 : f32 to vector<2x32xf32>
      %c0_14 = arith.constant 0 : index
      %c0_15 = arith.constant 0 : index
      %16 = vector.load %arg6[%c0_14, %c0_15] : memref<2x32xf32, #tpu.memory_space<vmem>>, vector<2x32xf32>
      tpu.vector_store %arg6[%c0_14, %c0_15], %15 {strides = array<i32>} : memref<2x32xf32, #tpu.memory_space<vmem>>, vector<2x32xf32>,
      %cst_16 = arith.constant 0xFF800000 : f32
      %17 = vector.broadcast %cst_16 : f32 to vector<2x32xf32>
      %c0_17 = arith.constant 0 : index
      %c0_18 = arith.constant 0 : index
      %18 = vector.load %arg7[%c0_17, %c0_18] : memref<2x32xf32, #tpu.memory_space<vmem>>, vector<2x32xf32>
      tpu.vector_store %arg7[%c0_17, %c0_18], %17 {strides = array<i32>} : memref<2x32xf32, #tpu.memory_space<vmem>>, vector<2x32xf32>,
    } else {
    }
    %c0 = arith.constant 0 : index
    %c0_1 = arith.constant 0 : index
    %c0_2 = arith.constant 0 : index
    %3 = vector.load %arg2[%c0, %c0_1, %c0_2] : memref<2x32x128xf32, #tpu.memory_space<vmem>>, vector<2x32x128xf32>
    %c0_3 = arith.constant 0 : index
    %c0_4 = arith.constant 0 : index
    %4 = vector.load %arg6[%c0_3, %c0_4] : memref<2x32xf32, #tpu.memory_space<vmem>>, vector<2x32xf32>
    %cst = arith.constant dense<0.000000e+00> : vector<2x32xf32>
    %5 = vector.multi_reduction <add>, %3, %cst [2] : vector<2x32x128xf32> to vector<2x32xf32>
    %6 = arith.addf %4, %5 : vector<2x32xf32>
    %c0_5 = arith.constant 0 : index
    %c0_6 = arith.constant 0 : index
    %7 = vector.load %arg6[%c0_5, %c0_6] : memref<2x32xf32, #tpu.memory_space<vmem>>, vector<2x32xf32>
    tpu.vector_store %arg6[%c0_5, %c0_6], %6 {strides = array<i32>} : memref<2x32xf32, #tpu.memory_space<vmem>>, vector<2x32xf32>,
    %c0_7 = arith.constant 0 : index
    %c0_8 = arith.constant 0 : index
    %8 = vector.load %arg7[%c0_7, %c0_8] : memref<2x32xf32, #tpu.memory_space<vmem>>, vector<2x32xf32>
    %cst_9 = arith.constant dense<0xFF800000> : vector<2x32xf32>
    %9 = vector.multi_reduction <maximumf>, %3, %cst_9 [2] : vector<2x32x128xf32> to vector<2x32xf32>
    %10 = arith.maximumf %8, %9 : vector<2x32xf32>
    %c0_10 = arith.constant 0 : index
    %c0_11 = arith.constant 0 : index
    %11 = vector.load %arg7[%c0_10, %c0_11] : memref<2x32xf32, #tpu.memory_space<vmem>>, vector<2x32xf32>
    tpu.vector_store %arg7[%c0_10, %c0_11], %10 {strides = array<i32>} : memref<2x32xf32, #tpu.memory_space<vmem>>, vector<2x32xf32>,
    %c1_i32 = arith.constant 1 : i32
    %12 = arith.cmpi eq, %arg1, %c1_i32 : i32
    %13 = arith.extui %12 : i1 to i32
    %c0_i32_12 = arith.constant 0 : i32
    %14 = arith.cmpi ne, %13, %c0_i32_12 : i32
    scf.if %14 {
      %c0_13 = arith.constant 0 : index
      %c0_14 = arith.constant 0 : index
      %15 = vector.load %arg3[%c0_13, %c0_14] : memref<32x2xf32, #tpu.memory_space<vmem>>, vector<32x2xf32>
      %c0_15 = arith.constant 0 : index
      %c0_16 = arith.constant 0 : index
      %16 = vector.load %arg4[%c0_15, %c0_16] : memref<2x32xf32, #tpu.memory_space<vmem>>, vector<2x32xf32>
      %c0_17 = arith.constant 0 : index
      %c0_18 = arith.constant 0 : index
      %17 = vector.load %arg6[%c0_17, %c0_18] : memref<2x32xf32, #tpu.memory_space<vmem>>, vector<2x32xf32>
      %cst_19 = arith.constant 3.906250e-03 : f32
      %18 = vector.broadcast %cst_19 : f32 to vector<2x32xf32>
      %19 = arith.mulf %17, %18 : vector<2x32xf32>
      %c0_20 = arith.constant 0 : index
      %c0_21 = arith.constant 0 : index
      %20 = vector.load %arg7[%c0_20, %c0_21] : memref<2x32xf32, #tpu.memory_space<vmem>>, vector<2x32xf32>
      %cst_22 = arith.constant dense<0.000000e+00> : vector<2x2xf32>
      %21 = tpu.matmul %19, %15, %cst_22 {dimension_numbers = #tpu.dot_dimension_numbers<[1], [0], [0], [1], [0, 0, 1, 1], [], []>} : vector<2x32xf32>, vector<32x2xf32>, vector<2x2xf32> -> vector<2x2xf32>
      %cst_23 = arith.constant 0.000000e+00 : f32
      %22 = vector.broadcast %cst_23 : f32 to vector<2x2xf32>
      %23 = arith.maximumf %21, %22 : vector<2x2xf32>
      %cst_24 = arith.constant dense<0.000000e+00> : vector<2x32xf32>
      %24 = tpu.matmul %23, %16, %cst_24 {dimension_numbers = #tpu.dot_dimension_numbers<[1], [0], [0], [1], [0, 0, 1, 1], [], []>} : vector<2x2xf32>, vector<2x32xf32>, vector<2x32xf32> -> vector<2x32xf32>
      %cst_25 = arith.constant dense<0.000000e+00> : vector<2x2xf32>
      %25 = tpu.matmul %20, %15, %cst_25 {dimension_numbers = #tpu.dot_dimension_numbers<[1], [0], [0], [1], [0, 0, 1, 1], [], []>} : vector<2x32xf32>, vector<32x2xf32>, vector<2x2xf32> -> vector<2x2xf32>
      %cst_26 = arith.constant 0.000000e+00 : f32
      %26 = vector.broadcast %cst_26 : f32 to vector<2x2xf32>
      %27 = arith.maximumf %25, %26 : vector<2x2xf32>
      %cst_27 = arith.constant dense<0.000000e+00> : vector<2x32xf32>
      %28 = tpu.matmul %27, %16, %cst_27 {dimension_numbers = #tpu.dot_dimension_numbers<[1], [0], [0], [1], [0, 0, 1, 1], [], []>} : vector<2x2xf32>, vector<2x32xf32>, vector<2x32xf32> -> vector<2x32xf32>
      %29 = arith.addf %24, %28 : vector<2x32xf32>
      %30 = arith.negf %29 : vector<2x32xf32>
      %31 = math.exp %30 : vector<2x32xf32>
      %cst_28 = arith.constant 1.000000e+00 : f32
      %32 = vector.broadcast %cst_28 : f32 to vector<2x32xf32>
      %33 = arith.addf %32, %31 : vector<2x32xf32>
      %34 = arith.divf %32, %33 : vector<2x32xf32>
      %c0_29 = arith.constant 0 : index
      %c0_30 = arith.constant 0 : index
      %35 = vector.load %arg5[%c0_29, %c0_30] : memref<2x32xf32, #tpu.memory_space<vmem>>, vector<2x32xf32>
      tpu.vector_store %arg5[%c0_29, %c0_30], %34 {strides = array<i32>} : memref<2x32xf32, #tpu.memory_space<vmem>>, vector<2x32xf32>,
    } else {
    }
    return
  }
  func.func @transform_0(%arg0: i32, %arg1: i32) -> (i32, i32, i32) {
    %c0_i32 = arith.constant 0 : i32
    %c0_i32_0 = arith.constant 0 : i32
    return %arg0, %c0_i32, %arg1 : i32, i32, i32
  }
  func.func @transform_1(%arg0: i32, %arg1: i32) -> (i32, i32) {
    %c0_i32 = arith.constant 0 : i32
    %c0_i32_0 = arith.constant 0 : i32
    %c0_i32_1 = arith.constant 0 : i32
    return %c0_i32, %c0_i32_0 : i32, i32
  }
  func.func @transform_2(%arg0: i32, %arg1: i32) -> (i32, i32) {
    %c0_i32 = arith.constant 0 : i32
    %c0_i32_0 = arith.constant 0 : i32
    %c0_i32_1 = arith.constant 0 : i32
    return %c0_i32, %c0_i32_0 : i32, i32
  }
  func.func @transform_3(%arg0: i32, %arg1: i32) -> (i32, i32) {
    %c0_i32 = arith.constant 0 : i32
    %c0_i32_0 = arith.constant 0 : i32
    return %arg0, %c0_i32 : i32, i32
  }
}

</mosaic_0001>

<llo_original>
// kernel: tpu_custom_call.1
$region0: #{tpu_custom_call.1}
  #allocation0 [shape = 'u32[]', space=smem, size = 0x4, offset = 0x4, fixed_abs, tag = 'smem constant byte address 0x4 - core index']
  #allocation1 [shape = 'u32[144,128]{1,0:T(1,128)}', space=vmem, size = 0x12000, scoped, tag = 'internal scratch']
  #allocation2 [shape = 'f32[2,32]{1,0:T(2,128)}', space=vmem, size = 0x400, scoped, tag = 'scratch operand']
  #allocation3 [shape = 'f32[2,32]{1,0:T(2,128)}', space=vmem, size = 0x400, scoped, tag = 'scratch operand']
  %s0 = inlined_call_operand.hbm [shape: f32[2,32,256], index: 0, kind: input, shape index: {}]
  %s1 = inlined_call_operand.vmem [shape: f32[32,2], index: 1, kind: input, shape index: {}]
  %s2 = inlined_call_operand.vmem [shape: f32[2,32], index: 2, kind: input, shape index: {}]
  %s3 = inlined_call_operand.hbm [shape: f32[2,32], index: 3, kind: output, shape index: {}]
  %s4 = sld [smem:[#allocation0]]
  $region57: #{tpu_custom_call.1} parent=0
    _
  %s6 = ssub.s32 1, %s4
  %s7 = scalar_select 0, %s6, %s4
  $region1: #{tpu_custom_call.1} parent=0
    #allocation4 [shape = 'u8[65536]{0}', space=vmem, size = 0x10000, scoped, tag = 'input window, operand 0']
    #allocation5 [shape = 's32[2]{0}', space=sflag, size = 0x8, scoped, tag = 'scoped memory for tpu_custom_call.1']
    #allocation6 [shape = 's32[2]{0}', space=sflag, size = 0x8, scoped, tag = 'scoped memory for tpu_custom_call.1']
    #allocation7 [shape = 'u8[1024]{0}', space=vmem, size = 0x400, scoped, tag = 'output window, operand 0, single buffered']
    %8 = vsyncpa [#allocation5], 0
    %s9 = scalar_lea.sflag [#allocation5], 1
    %10 = vsyncpa %s9, 0
    %11 = vsyncpa [#allocation6], 0
    loop: start=0, step=1, limit=4
    $region2: #{tpu_custom_call.1} parent=1 // loop_pre_header
      _
    $region3: #{tpu_custom_call.1} parent=1 // loop_header
      %s13 = sphi 0, %s17
      %p14 = scmp.ge.s32.totalorder %s13, 4
      %s20 = sphi 0, %s32
      %s21 = sphi 0, %s28
      %s22 = sphi 0, %s20
      %s23 = sphi 0, %s21
      %s24 = sphi 0, %s22
      %s25 = sphi 0, %s23
      %s37 = sphi 0, %s39
      %s40 = sphi 0, %s37
      %s41 = sphi 0, %s40
      %s57 = sphi 0, %s41
      %s61 = sphi 0, %s61
      %s63 = sphi 0, %s61
      %s64 = sphi 0, %s63
      %s78 = sphi 0, %s64
      %s82 = sphi 0, %s82
      %s84 = sphi 0, %s82
      %s85 = sphi 0, %s84
      %s99 = sphi 0, %s85
      %s105 = sphi 0, %s107
      %s108 = sphi 0, %s105
      %s109 = sphi 0, %s108
      %s125 = sphi 0, %s109
    $region4: #{tpu_custom_call.1} parent=1 // loop_header_branch
      %16 = sbr.rel (%p14) target = $region8
    $region5: #{tpu_custom_call.1} parent=1 // loop_body
      %s18 = ssub.s32 %s13, 1
      %s19 = ssub.s32 %s13, 2
      %s26 = sadd.s32 1, %s21
      %p27 = scmp.ge.s32.totalorder %s26, 2
      %s28 = scalar_select %p27, 0, %s26
      %s29 = sadd.s32 1, %s20
      %s30 = scalar_select %p27, %s29, %s20
      %p31 = scmp.ge.s32.totalorder %s30, 1
      %s32 = scalar_select %p31, 0, %s30
      %s33 = ssub.s32 %s20, %s32
      %s34 = ssub.s32 %s21, %s28
      %s35 = sor.u32 %s33, %s34
      %p36 = scmp.eq.s32.totalorder %s35, 0
      %s38 = sadd.s32 %s37, 1
      %s39 = scalar_select %p36, %s37, %s38
      %p42 = pneg %p36
      %p43 = scmp.eq.s32.totalorder %s13, 1
      %p44 = por %p42, %p43
      %p45 = scmp.ne.s32.totalorder %s37, %s40
      %p46 = scmp.eq.s32.totalorder %s13, 0
      %p47 = por %p45, %p46
      %p48 = scmp.ne.s32.totalorder %s37, %s40
      %p49 = scmp.eq.s32.totalorder %s18, 1
      %p50 = por %p48, %p49
      %p51 = scmp.ne.s32.totalorder %s40, %s41
      %p52 = scmp.eq.s32.totalorder %s18, 0
      %p53 = por %p51, %p52
      %p54 = scmp.ne.s32.totalorder %s40, %s41
      %p55 = scmp.eq.s32.totalorder %s19, 1
      %p56 = por %p54, %p55
      %p58 = scmp.ne.s32.totalorder %s41, %s57
      %p59 = scmp.eq.s32.totalorder %s19, 0
      %p60 = por %p58, %p59
      %s62 = sadd.s32 %s61, 1
      %p65 = scmp.eq.s32.totalorder %s13, 1
      %p66 = scmp.ne.s32.totalorder %s61, %s63
      %p67 = scmp.eq.s32.totalorder %s13, 0
      %p68 = por %p66, %p67
      %p69 = scmp.ne.s32.totalorder %s61, %s63
      %p70 = scmp.eq.s32.totalorder %s18, 1
      %p71 = por %p69, %p70
      %p72 = scmp.ne.s32.totalorder %s63, %s64
      %p73 = scmp.eq.s32.totalorder %s18, 0
      %p74 = por %p72, %p73
      %p75 = scmp.ne.s32.totalorder %s63, %s64
      %p76 = scmp.eq.s32.totalorder %s19, 1
      %p77 = por %p75, %p76
      %p79 = scmp.ne.s32.totalorder %s64, %s78
      %p80 = scmp.eq.s32.totalorder %s19, 0
      %p81 = por %p79, %p80
      %s83 = sadd.s32 %s82, 1
      %p86 = scmp.eq.s32.totalorder %s13, 1
      %p87 = scmp.ne.s32.totalorder %s82, %s84
      %p88 = scmp.eq.s32.totalorder %s13, 0
      %p89 = por %p87, %p88
      %p90 = scmp.ne.s32.totalorder %s82, %s84
      %p91 = scmp.eq.s32.totalorder %s18, 1
      %p92 = por %p90, %p91
      %p93 = scmp.ne.s32.totalorder %s84, %s85
      %p94 = scmp.eq.s32.totalorder %s18, 0
      %p95 = por %p93, %p94
      %p96 = scmp.ne.s32.totalorder %s84, %s85
      %p97 = scmp.eq.s32.totalorder %s19, 1
      %p98 = por %p96, %p97
      %p100 = scmp.ne.s32.totalorder %s85, %s99
      %p101 = scmp.eq.s32.totalorder %s19, 0
      %p102 = por %p100, %p101
      %s103 = ssub.s32 %s20, %s32
      %p104 = scmp.eq.s32.totalorder %s103, 0
      %s106 = sadd.s32 %s105, 1
      %s107 = scalar_select %p104, %s105, %s106
      %p110 = pneg %p104
      %p111 = scmp.eq.s32.totalorder %s13, 1
      %p112 = por %p110, %p111
      %p113 = scmp.ne.s32.totalorder %s105, %s108
      %p114 = scmp.eq.s32.totalorder %s13, 0
      %p115 = por %p113, %p114
      %p116 = scmp.ne.s32.totalorder %s105, %s108
      %p117 = scmp.eq.s32.totalorder %s18, 1
      %p118 = por %p116, %p117
      %p119 = scmp.ne.s32.totalorder %s108, %s109
      %p120 = scmp.eq.s32.totalorder %s18, 0
      %p121 = por %p119, %p120
      %p122 = scmp.ne.s32.totalorder %s108, %s109
      %p123 = scmp.eq.s32.totalorder %s19, 1
      %p124 = por %p122, %p123
      %p126 = scmp.ne.s32.totalorder %s109, %s125
      %p127 = scmp.eq.s32.totalorder %s19, 0
      %p128 = por %p126, %p127
      %p129 = scmp.le.s32.totalorder 1, %s13
      %p130 = scmp.lt.s32.totalorder %s13, 3
      %p131 = pnand %p129, %p130
      %p132 = pneg %p131
      // Predicated region
      $region9: #{tpu_custom_call.1} parent=5 // pred_check
        _
      $region10: #{tpu_custom_call.1} parent=5 // pred_check_branch
        %134 = sbr.rel (%p131) target = $region12
      $region11: #{tpu_custom_call.1} parent=5 // pred_region
        %s135 = ssub.s32 %s13, 1
        // Predicated region
        $region13: #{tpu_custom_call.1} parent=11 // pred_check
          %p136 = pneg %p74
        $region14: #{tpu_custom_call.1} parent=11 // pred_check_branch
          %138 = sbr.rel (%p136) target = $region16
        $region15: #{tpu_custom_call.1} parent=11 // pred_region
          _
        $region16: #{tpu_custom_call.1} parent=11 // pred_fallthru
          _
        // Predicated region
        $region17: #{tpu_custom_call.1} parent=11 // pred_check
          %p139 = pneg %p95
        $region18: #{tpu_custom_call.1} parent=11 // pred_check_branch
          %141 = sbr.rel (%p139) target = $region20
        $region19: #{tpu_custom_call.1} parent=11 // pred_region
          _
        $region20: #{tpu_custom_call.1} parent=11 // pred_fallthru
          _
      $region12: #{tpu_custom_call.1} parent=5 // pred_fallthru
        _
      %p142 = scmp.lt.s32.totalorder %s13, 2
      // Predicated region
      $region21: #{tpu_custom_call.1} parent=5 // pred_check
        %p143 = pneg %p142
      $region22: #{tpu_custom_call.1} parent=5 // pred_check_branch
        %145 = sbr.rel (%p143) target = $region24
      $region23: #{tpu_custom_call.1} parent=5 // pred_region
        // Predicated region
        $region25: #{tpu_custom_call.1} parent=23 // pred_check
          %p146 = pneg %p47
        $region26: #{tpu_custom_call.1} parent=23 // pred_check_branch
          %148 = sbr.rel (%p146) target = $region28
        $region27: #{tpu_custom_call.1} parent=23 // pred_region
          %s149 = sand.u32 %s37, 1
          %s150 = scalar_lea.sflag [#allocation5], %s149
          %s151 = sand.u32 %s37, 1
          %s152 = smul.addr %s151, 64
          %s153 = scalar_lea.vmem [#allocation4], %s152
          %s154 = smul.u32 2, %s20
          %s156 = ssub.s32 1024, 1024
          %157 = vsyncadd %s150, %s156
          %s158 = smul.addr %s154, 8
          %s159 = sadd.s32 %s21, %s158
          %s160 = smul.addr %s159, 128
          %s161 = scalar_lea.hbm %s0, %s160
          %s162 = sshll.u32 %s153, 4
          %s163 = int_to_ptr.vmem [resolvable:$true] %s162
          %168 = dma.hbm_to_vmem [thread:$0]  %s161, 1024, %s163, %s150, 256, 128, 8
        $region28: #{tpu_custom_call.1} parent=23 // pred_fallthru
          _
      $region24: #{tpu_custom_call.1} parent=5 // pred_fallthru
        _
      %p169 = scmp.le.s32.totalorder 1, %s13
      %p170 = scmp.lt.s32.totalorder %s13, 3
      %p171 = pnand %p169, %p170
      %p172 = pneg %p171
      // Predicated region
      $region29: #{tpu_custom_call.1} parent=5 // pred_check
        _
      $region30: #{tpu_custom_call.1} parent=5 // pred_check_branch
        %174 = sbr.rel (%p171) target = $region32
      $region31: #{tpu_custom_call.1} parent=5 // pred_region
        %s175 = ssub.s32 %s13, 1
        %s176 = sand.u32 %s40, 1
        %s177 = scalar_lea.sflag [#allocation5], %s176
        %s178 = sand.u32 %s40, 1
        %s179 = smul.addr %s178, 64
        %s180 = scalar_lea.vmem [#allocation4], %s179
        // Predicated region
        $region33: #{tpu_custom_call.1} parent=31 // pred_check
          %p181 = pneg %p53
        $region34: #{tpu_custom_call.1} parent=31 // pred_check_branch
          %183 = sbr.rel (%p181) target = $region36
        $region35: #{tpu_custom_call.1} parent=31 // pred_region
          %184 = dma.done %s177, 1024
        $region36: #{tpu_custom_call.1} parent=31 // pred_fallthru
          _
        %s185 = sand.u32 %s40, 1
        %s186 = scalar_lea.sflag [#allocation5], %s185
        %s187 = sand.u32 %s40, 1
        %s188 = smul.addr %s187, 64
        %s189 = scalar_lea.vmem [#allocation4], %s188
        %p190 = pneg %p53
        %p191 = pneg %p50
        %p192 = pneg %p74
        %p193 = pneg %p71
        %p194 = pneg %p95
        %p195 = pneg %p92
        %p196 = pneg %p121
        %p197 = pneg %p118
        %s198 = smul.u32 2, %s22
        %p199 = scmp.eq.s32.totalorder %s23, 0
        // Predicated region
        $region37: #{tpu_custom_call.1} parent=31 // pred_check
          %p200 = pneg %p199
        $region38: #{tpu_custom_call.1} parent=31 // pred_check_branch
          %202 = sbr.rel (%p200) target = $region40
        $region39: #{tpu_custom_call.1} parent=31 // pred_region
          %vm203 = vcmask 254976
          %204 = vst.msk [vmem:[#allocation2] sm:$0x3] %vm203, 0.0
          %205 = vst.msk [vmem:[#allocation3] sm:$0x3] %vm203, -inf
        $region40: #{tpu_custom_call.1} parent=31 // pred_fallthru
          _
        %v206 = vld [vmem:[%s180] sm:$0xff]
        %v207 = vld [vmem:[%s180 + $0x8] sm:$0xff]
        %v208 = vld [vmem:[%s180 + $0x10] sm:$0xff]
        %v209 = vld [vmem:[%s180 + $0x18] sm:$0xff]
        %v210 = vld [vmem:[%s180 + $0x20] sm:$0xff]
        %v211 = vld [vmem:[%s180 + $0x28] sm:$0xff]
        %v212 = vld [vmem:[%s180 + $0x30] sm:$0xff]
        %v213 = vld [vmem:[%s180 + $0x38] sm:$0xff]
        %v214 = vld [vmem:[#allocation2] sm:$0x3]
        %215 = vadd.xlane.f32.xlu0 %v206
        %v216 = vpop.xlane.xlu0 %215
        %217 = vadd.xlane.f32.xlu0 %v207
        %v218 = vpop.xlane.xlu0 %217
        %219 = vadd.xlane.f32.xlu0 %v208
        %v220 = vpop.xlane.xlu0 %219
        %221 = vadd.xlane.f32.xlu0 %v209
        %v222 = vpop.xlane.xlu0 %221
        %223 = vadd.xlane.f32.xlu0 %v210
        %v224 = vpop.xlane.xlu0 %223
        %225 = vadd.xlane.f32.xlu0 %v211
        %v226 = vpop.xlane.xlu0 %225
        %227 = vadd.xlane.f32.xlu0 %v212
        %v228 = vpop.xlane.xlu0 %227
        %229 = vadd.xlane.f32.xlu0 %v213
        %v230 = vpop.xlane.xlu0 %229
        %v239 = vlaneseq
        %v240 = vand.u32 %v239, 127
        %v241 = vlaneseq
        %v242 = vshrl.u32 %v241, 7
        %v243 = vsub.s32 %v240, %v242
        %v244 = vrot.slane %v216, %v243
        %v245 = vadd.s32 %v240, 4294967288
        %v246 = vlaneseq
        %v247 = vshrl.u32 %v246, 7
        %v248 = vsub.s32 %v245, %v247
        %v249 = vrot.slane %v218, %v248
        %vm250 = vcmask 130112
        %v251 = vsel %vm250, %v249, %v244
        %v252 = vadd.s32 %v240, 4294967280
        %v253 = vlaneseq
        %v254 = vshrl.u32 %v253, 7
        %v255 = vsub.s32 %v252, %v254
        %v256 = vrot.slane %v220, %v255
        %vm257 = vcmask 195712
        %v258 = vsel %vm257, %v256, %v251
        %v259 = vadd.s32 %v240, 4294967272
        %v260 = vlaneseq
        %v261 = vshrl.u32 %v260, 7
        %v262 = vsub.s32 %v259, %v261
        %v263 = vrot.slane %v222, %v262
        %vm264 = vcmask 261312
        %v265 = vsel %vm264, %v263, %v258
        %v266 = vlaneseq
        %v267 = vshrl.u32 %v266, 7
        %v268 = vsub.s32 %v240, %v267
        %v269 = vrot.slane %v224, %v268
        %v270 = vlaneseq
        %v271 = vshrl.u32 %v270, 7
        %v272 = vsub.s32 %v245, %v271
        %v273 = vrot.slane %v226, %v272
        %v274 = vsel %vm250, %v273, %v269
        %v275 = vlaneseq
        %v276 = vshrl.u32 %v275, 7
        %v277 = vsub.s32 %v252, %v276
        %v278 = vrot.slane %v228, %v277
        %v279 = vsel %vm257, %v278, %v274
        %v280 = vlaneseq
        %v281 = vshrl.u32 %v280, 7
        %v282 = vsub.s32 %v259, %v281
        %v283 = vrot.slane %v230, %v282
        %v284 = vsel %vm264, %v283, %v279
        %vm285 = vcmask 1041409
        %v286 = vsel %vm285, %v284, %v265
        %v288 = vadd.f32 %v214, %v286
        %vm289 = vcmask 254976
        %290 = vst.msk [vmem:[#allocation2] sm:$0x3] %vm289, %v288
        %v291 = vld [vmem:[#allocation3] sm:$0x3]
        %292 = vmax.xlane.f32.xlu0 %v206
        %v293 = vpop.xlane.xlu0 %292
        %294 = vmax.xlane.f32.xlu0 %v207
        %v295 = vpop.xlane.xlu0 %294
        %296 = vmax.xlane.f32.xlu0 %v208
        %v297 = vpop.xlane.xlu0 %296
        %298 = vmax.xlane.f32.xlu0 %v209
        %v299 = vpop.xlane.xlu0 %298
        %300 = vmax.xlane.f32.xlu0 %v210
        %v301 = vpop.xlane.xlu0 %300
        %302 = vmax.xlane.f32.xlu0 %v211
        %v303 = vpop.xlane.xlu0 %302
        %304 = vmax.xlane.f32.xlu0 %v212
        %v305 = vpop.xlane.xlu0 %304
        %306 = vmax.xlane.f32.xlu0 %v213
        %v307 = vpop.xlane.xlu0 %306
        %v316 = vlaneseq
        %v317 = vshrl.u32 %v316, 7
        %v318 = vsub.s32 %v240, %v317
        %v319 = vrot.slane %v293, %v318
        %v320 = vlaneseq
        %v321 = vshrl.u32 %v320, 7
        %v322 = vsub.s32 %v245, %v321
        %v323 = vrot.slane %v295, %v322
        %v324 = vsel %vm250, %v323, %v319
        %v325 = vlaneseq
        %v326 = vshrl.u32 %v325, 7
        %v327 = vsub.s32 %v252, %v326
        %v328 = vrot.slane %v297, %v327
        %v329 = vsel %vm257, %v328, %v324
        %v330 = vlaneseq
        %v331 = vshrl.u32 %v330, 7
        %v332 = vsub.s32 %v259, %v331
        %v333 = vrot.slane %v299, %v332
        %v334 = vsel %vm264, %v333, %v329
        %v335 = vlaneseq
        %v336 = vshrl.u32 %v335, 7
        %v337 = vsub.s32 %v240, %v336
        %v338 = vrot.slane %v301, %v337
        %v339 = vlaneseq
        %v340 = vshrl.u32 %v339, 7
        %v341 = vsub.s32 %v245, %v340
        %v342 = vrot.slane %v303, %v341
        %v343 = vsel %vm250, %v342, %v338
        %v344 = vlaneseq
        %v345 = vshrl.u32 %v344, 7
        %v346 = vsub.s32 %v252, %v345
        %v347 = vrot.slane %v305, %v346
        %v348 = vsel %vm257, %v347, %v343
        %v349 = vlaneseq
        %v350 = vshrl.u32 %v349, 7
        %v351 = vsub.s32 %v259, %v350
        %v352 = vrot.slane %v307, %v351
        %v353 = vsel %vm264, %v352, %v348
        %v354 = vsel %vm285, %v353, %v334
        %v356 = vmax.f32 %v291, %v354
        %357 = vst.msk [vmem:[#allocation3] sm:$0x3] %vm289, %v356
        %p358 = scmp.eq.s32.totalorder %s23, 1
        // Predicated region
        $region41: #{tpu_custom_call.1} parent=31 // pred_check
          %p359 = pneg %p358
        $region42: #{tpu_custom_call.1} parent=31 // pred_check_branch
          %361 = sbr.rel (%p359) target = $region44
        $region43: #{tpu_custom_call.1} parent=31 // pred_region
          %v362 = vld [vmem:[%s1] sm:$0xff]
          %v363 = vld [vmem:[%s1 + $0x8] sm:$0xff]
          %v364 = vld [vmem:[%s1 + $0x10] sm:$0xff]
          %v365 = vld [vmem:[%s1 + $0x18] sm:$0xff]
          %v366 = vld [vmem:[%s2] sm:$0x3]
          %v367 = vld [vmem:[#allocation2] sm:$0x3]
          %v368 = vmul.f32 %v367, 0.00390625
          %v369 = vld [vmem:[#allocation3] sm:$0x3]
          %vm370 = vcmask 261120
          %v372 = vsel %vm370, %v368, 0
          %374 = vmatprep.subr.mxu0 0.0
          %375 = vmatpush1.msra.mxu0 0.0
          %376 = vmatprep.subr.mxu0 0.0
          %377 = vmatpush1.msra.mxu0 0.0
          %378 = vmatprep.subr.mxu0 0.0
          %379 = vmatpush1.msra.mxu0 0.0
          %380 = vmatprep.subr.mxu0 0.0
          %381 = vmatpush1.msra.mxu0 0.0
          %382 = vmatprep.subr.mxu0 0.0
          %383 = vmatpush1.msra.mxu0 0.0
          %384 = vmatprep.subr.mxu0 0.0
          %385 = vmatpush1.msra.mxu0 0.0
          %386 = vmatprep.subr.mxu0 0.0
          %387 = vmatpush1.msra.mxu0 0.0
          %388 = vmatprep.subr.mxu0 0.0
          %389 = vmatpush1.msra.mxu0 0.0
          %390 = vmatprep.subr.mxu0 0.0
          %391 = vmatpush1.msra.mxu0 0.0
          %392 = vmatprep.subr.mxu0 0.0
          %393 = vmatpush1.msra.mxu0 0.0
          %394 = vmatprep.subr.mxu0 0.0
          %395 = vmatpush1.msra.mxu0 0.0
          %396 = vmatprep.subr.mxu0 0.0
          %397 = vmatpush1.msra.mxu0 0.0
          %398 = vmatprep.subr.mxu0 0.0
          %399 = vmatpush1.msra.mxu0 %v365
          %400 = vmatprep.subr.mxu0 0.0
          %401 = vmatpush1.msra.mxu0 %v364
          %402 = vmatprep.subr.mxu0 0.0
          %403 = vmatpush1.msra.mxu0 %v363
          %404 = vmatprep.subr.mxu0 0.0
          %405 = vmatpush1.msra.mxu0 %v362
          %406 = vmatprep.subr.mxu0 0.0
          %407 = vmatpush2.msra.mxu0 0.0
          %408 = vmatprep.subr.mxu0 0.0
          %409 = vmatpush2.msra.mxu0 0.0
          %410 = vmatprep.subr.mxu0 0.0
          %411 = vmatpush2.msra.mxu0 0.0
          %412 = vmatprep.subr.mxu0 0.0
          %413 = vmatpush2.msra.mxu0 0.0
          %414 = vmatprep.subr.mxu0 0.0
          %415 = vmatpush2.msra.mxu0 0.0
          %416 = vmatprep.subr.mxu0 0.0
          %417 = vmatpush2.msra.mxu0 0.0
          %418 = vmatprep.subr.mxu0 0.0
          %419 = vmatpush2.msra.mxu0 0.0
          %420 = vmatprep.subr.mxu0 0.0
          %421 = vmatpush2.msra.mxu0 0.0
          %422 = vmatprep.subr.mxu0 0.0
          %423 = vmatpush2.msra.mxu0 0.0
          %424 = vmatprep.subr.mxu0 0.0
          %425 = vmatpush2.msra.mxu0 0.0
          %426 = vmatprep.subr.mxu0 0.0
          %427 = vmatpush2.msra.mxu0 0.0
          %428 = vmatprep.subr.mxu0 0.0
          %429 = vmatpush2.msra.mxu0 0.0
          %430 = vmatprep.subr.mxu0 0.0
          %431 = vmatpush2.msra.mxu0 0.0
          %432 = vmatprep.subr.mxu0 0.0
          %433 = vmatpush2.msra.mxu0 0.0
          %434 = vmatprep.subr.mxu0 0.0
          %435 = vmatpush2.msra.mxu0 0.0
          %436 = vmatprep.subr.mxu0 0.0
          %437 = vmatpush2.msra.mxu0 0.0
          %438 = vmatprep.mubr.f32.mxu0 0.0
          %439 = vmatmul.mubr.f32.gmra.mxu0 %v372
          %v440 = vpop.f32.mrf.mxu0
          %v441 = vadd.f32 0.0, %v440
          %v442 = vpop.f32.mrf.mxu0
          %443 = vdwg.mxu0
          %v444 = vmax.f32 %v441, 0.0
          %v446 = vsel %vm370, %v369, 0
          %448 = vmatprep.subr.mxu0 0.0
          %449 = vmatpush1.msra.mxu0 0.0
          %450 = vmatprep.subr.mxu0 0.0
          %451 = vmatpush1.msra.mxu0 0.0
          %452 = vmatprep.subr.mxu0 0.0
          %453 = vmatpush1.msra.mxu0 0.0
          %454 = vmatprep.subr.mxu0 0.0
          %455 = vmatpush1.msra.mxu0 0.0
          %456 = vmatprep.subr.mxu0 0.0
          %457 = vmatpush1.msra.mxu0 0.0
          %458 = vmatprep.subr.mxu0 0.0
          %459 = vmatpush1.msra.mxu0 0.0
          %460 = vmatprep.subr.mxu0 0.0
          %461 = vmatpush1.msra.mxu0 0.0
          %462 = vmatprep.subr.mxu0 0.0
          %463 = vmatpush1.msra.mxu0 0.0
          %464 = vmatprep.subr.mxu0 0.0
          %465 = vmatpush1.msra.mxu0 0.0
          %466 = vmatprep.subr.mxu0 0.0
          %467 = vmatpush1.msra.mxu0 0.0
          %468 = vmatprep.subr.mxu0 0.0
          %469 = vmatpush1.msra.mxu0 0.0
          %470 = vmatprep.subr.mxu0 0.0
          %471 = vmatpush1.msra.mxu0 0.0
          %472 = vmatprep.subr.mxu0 0.0
          %473 = vmatpush1.msra.mxu0 %v365
          %474 = vmatprep.subr.mxu0 0.0
          %475 = vmatpush1.msra.mxu0 %v364
          %476 = vmatprep.subr.mxu0 0.0
          %477 = vmatpush1.msra.mxu0 %v363
          %478 = vmatprep.subr.mxu0 0.0
          %479 = vmatpush1.msra.mxu0 %v362
          %480 = vmatprep.subr.mxu0 0.0
          %481 = vmatpush2.msra.mxu0 0.0
          %482 = vmatprep.subr.mxu0 0.0
          %483 = vmatpush2.msra.mxu0 0.0
          %484 = vmatprep.subr.mxu0 0.0
          %485 = vmatpush2.msra.mxu0 0.0
          %486 = vmatprep.subr.mxu0 0.0
          %487 = vmatpush2.msra.mxu0 0.0
          %488 = vmatprep.subr.mxu0 0.0
          %489 = vmatpush2.msra.mxu0 0.0
          %490 = vmatprep.subr.mxu0 0.0
          %491 = vmatpush2.msra.mxu0 0.0
          %492 = vmatprep.subr.mxu0 0.0
          %493 = vmatpush2.msra.mxu0 0.0
          %494 = vmatprep.subr.mxu0 0.0
          %495 = vmatpush2.msra.mxu0 0.0
          %496 = vmatprep.subr.mxu0 0.0
          %497 = vmatpush2.msra.mxu0 0.0
          %498 = vmatprep.subr.mxu0 0.0
          %499 = vmatpush2.msra.mxu0 0.0
          %500 = vmatprep.subr.mxu0 0.0
          %501 = vmatpush2.msra.mxu0 0.0
          %502 = vmatprep.subr.mxu0 0.0
          %503 = vmatpush2.msra.mxu0 0.0
          %504 = vmatprep.subr.mxu0 0.0
          %505 = vmatpush2.msra.mxu0 0.0
          %506 = vmatprep.subr.mxu0 0.0
          %507 = vmatpush2.msra.mxu0 0.0
          %508 = vmatprep.subr.mxu0 0.0
          %509 = vmatpush2.msra.mxu0 0.0
          %510 = vmatprep.subr.mxu0 0.0
          %511 = vmatpush2.msra.mxu0 0.0
          %512 = vmatprep.mubr.f32.mxu0 0.0
          %513 = vmatmul.mubr.f32.gmra.mxu0 %v446
          %v514 = vpop.f32.mrf.mxu0
          %v515 = vadd.f32 0.0, %v514
          %v516 = vpop.f32.mrf.mxu0
          %517 = vdwg.mxu0
          %v518 = vmax.f32 %v515, 0.0
          %vm519 = vcmask 15360
          %v521 = vsel %vm519, %v518, 0
          %vm523 = vcmask 1041408
          %v525 = vsel %vm523, %v366, 0
          %527 = vmatprep.subr.mxu0 0.0
          %528 = vmatpush1.msra.mxu0 0.0
          %529 = vmatprep.subr.mxu0 0.0
          %530 = vmatpush1.msra.mxu0 0.0
          %531 = vmatprep.subr.mxu0 0.0
          %532 = vmatpush1.msra.mxu0 0.0
          %533 = vmatprep.subr.mxu0 0.0
          %534 = vmatpush1.msra.mxu0 0.0
          %535 = vmatprep.subr.mxu0 0.0
          %536 = vmatpush1.msra.mxu0 0.0
          %537 = vmatprep.subr.mxu0 0.0
          %538 = vmatpush1.msra.mxu0 0.0
          %539 = vmatprep.subr.mxu0 0.0
          %540 = vmatpush1.msra.mxu0 0.0
          %541 = vmatprep.subr.mxu0 0.0
          %542 = vmatpush1.msra.mxu0 0.0
          %543 = vmatprep.subr.mxu0 0.0
          %544 = vmatpush1.msra.mxu0 0.0
          %545 = vmatprep.subr.mxu0 0.0
          %546 = vmatpush1.msra.mxu0 0.0
          %547 = vmatprep.subr.mxu0 0.0
          %548 = vmatpush1.msra.mxu0 0.0
          %549 = vmatprep.subr.mxu0 0.0
          %550 = vmatpush1.msra.mxu0 0.0
          %551 = vmatprep.subr.mxu0 0.0
          %552 = vmatpush1.msra.mxu0 0.0
          %553 = vmatprep.subr.mxu0 0.0
          %554 = vmatpush1.msra.mxu0 0.0
          %555 = vmatprep.subr.mxu0 0.0
          %556 = vmatpush1.msra.mxu0 0.0
          %557 = vmatprep.subr.mxu0 0.0
          %558 = vmatpush1.msra.mxu0 %v525
          %559 = vmatprep.subr.mxu0 0.0
          %560 = vmatpush2.msra.mxu0 0.0
          %561 = vmatprep.subr.mxu0 0.0
          %562 = vmatpush2.msra.mxu0 0.0
          %563 = vmatprep.subr.mxu0 0.0
          %564 = vmatpush2.msra.mxu0 0.0
          %565 = vmatprep.subr.mxu0 0.0
          %566 = vmatpush2.msra.mxu0 0.0
          %567 = vmatprep.subr.mxu0 0.0
          %568 = vmatpush2.msra.mxu0 0.0
          %569 = vmatprep.subr.mxu0 0.0
          %570 = vmatpush2.msra.mxu0 0.0
          %571 = vmatprep.subr.mxu0 0.0
          %572 = vmatpush2.msra.mxu0 0.0
          %573 = vmatprep.subr.mxu0 0.0
          %574 = vmatpush2.msra.mxu0 0.0
          %575 = vmatprep.subr.mxu0 0.0
          %576 = vmatpush2.msra.mxu0 0.0
          %577 = vmatprep.subr.mxu0 0.0
          %578 = vmatpush2.msra.mxu0 0.0
          %579 = vmatprep.subr.mxu0 0.0
          %580 = vmatpush2.msra.mxu0 0.0
          %581 = vmatprep.subr.mxu0 0.0
          %582 = vmatpush2.msra.mxu0 0.0
          %583 = vmatprep.subr.mxu0 0.0
          %584 = vmatpush2.msra.mxu0 0.0
          %585 = vmatprep.subr.mxu0 0.0
          %586 = vmatpush2.msra.mxu0 0.0
          %587 = vmatprep.subr.mxu0 0.0
          %588 = vmatpush2.msra.mxu0 0.0
          %589 = vmatprep.subr.mxu0 0.0
          %590 = vmatpush2.msra.mxu0 0.0
          %591 = vmatprep.mubr.f32.mxu0 0.0
          %592 = vmatmul.mubr.f32.gmra.mxu0 %v521
          %v593 = vpop.f32.mrf.mxu0
          %v594 = vadd.f32 0.0, %v593
          %v595 = vpop.f32.mrf.mxu0
          %596 = vdwg.mxu0
          %v598 = vsel %vm519, %v444, 0
          %600 = vmatprep.subr.mxu0 0.0
          %601 = vmatpush1.msra.mxu0 0.0
          %602 = vmatprep.subr.mxu0 0.0
          %603 = vmatpush1.msra.mxu0 0.0
          %604 = vmatprep.subr.mxu0 0.0
          %605 = vmatpush1.msra.mxu0 0.0
          %606 = vmatprep.subr.mxu0 0.0
          %607 = vmatpush1.msra.mxu0 0.0
          %608 = vmatprep.subr.mxu0 0.0
          %609 = vmatpush1.msra.mxu0 0.0
          %610 = vmatprep.subr.mxu0 0.0
          %611 = vmatpush1.msra.mxu0 0.0
          %612 = vmatprep.subr.mxu0 0.0
          %613 = vmatpush1.msra.mxu0 0.0
          %614 = vmatprep.subr.mxu0 0.0
          %615 = vmatpush1.msra.mxu0 0.0
          %616 = vmatprep.subr.mxu0 0.0
          %617 = vmatpush1.msra.mxu0 0.0
          %618 = vmatprep.subr.mxu0 0.0
          %619 = vmatpush1.msra.mxu0 0.0
          %620 = vmatprep.subr.mxu0 0.0
          %621 = vmatpush1.msra.mxu0 0.0
          %622 = vmatprep.subr.mxu0 0.0
          %623 = vmatpush1.msra.mxu0 0.0
          %624 = vmatprep.subr.mxu0 0.0
          %625 = vmatpush1.msra.mxu0 0.0
          %626 = vmatprep.subr.mxu0 0.0
          %627 = vmatpush1.msra.mxu0 0.0
          %628 = vmatprep.subr.mxu0 0.0
          %629 = vmatpush1.msra.mxu0 0.0
          %630 = vmatprep.subr.mxu0 0.0
          %631 = vmatpush1.msra.mxu0 %v525
          %632 = vmatprep.subr.mxu0 0.0
          %633 = vmatpush2.msra.mxu0 0.0
          %634 = vmatprep.subr.mxu0 0.0
          %635 = vmatpush2.msra.mxu0 0.0
          %636 = vmatprep.subr.mxu0 0.0
          %637 = vmatpush2.msra.mxu0 0.0
          %638 = vmatprep.subr.mxu0 0.0
          %639 = vmatpush2.msra.mxu0 0.0
          %640 = vmatprep.subr.mxu0 0.0
          %641 = vmatpush2.msra.mxu0 0.0
          %642 = vmatprep.subr.mxu0 0.0
          %643 = vmatpush2.msra.mxu0 0.0
          %644 = vmatprep.subr.mxu0 0.0
          %645 = vmatpush2.msra.mxu0 0.0
          %646 = vmatprep.subr.mxu0 0.0
          %647 = vmatpush2.msra.mxu0 0.0
          %648 = vmatprep.subr.mxu0 0.0
          %649 = vmatpush2.msra.mxu0 0.0
          %650 = vmatprep.subr.mxu0 0.0
          %651 = vmatpush2.msra.mxu0 0.0
          %652 = vmatprep.subr.mxu0 0.0
          %653 = vmatpush2.msra.mxu0 0.0
          %654 = vmatprep.subr.mxu0 0.0
          %655 = vmatpush2.msra.mxu0 0.0
          %656 = vmatprep.subr.mxu0 0.0
          %657 = vmatpush2.msra.mxu0 0.0
          %658 = vmatprep.subr.mxu0 0.0
          %659 = vmatpush2.msra.mxu0 0.0
          %660 = vmatprep.subr.mxu0 0.0
          %661 = vmatpush2.msra.mxu0 0.0
          %662 = vmatprep.subr.mxu0 0.0
          %663 = vmatpush2.msra.mxu0 0.0
          %664 = vmatprep.mubr.f32.mxu0 0.0
          %665 = vmatmul.mubr.f32.gmra.mxu0 %v598
          %v666 = vpop.f32.mrf.mxu0
          %v667 = vadd.f32 %v594, %v666
          %v668 = vpop.f32.mrf.mxu0
          %669 = vdwg.mxu0
          %v670 = vxor.u32 %v667, 2147483648
          %v671 = vmul.f32 %v670, 1.442695
          %v672 = vpow.pop %v671
          %v673 = vadd.f32 %v672, 1.0
          %v674 = vrcp.pop %v673
          %v675 = vmul.f32 1.0, %v674
          %676 = vst.msk [vmem:[#allocation7] sm:$0x3] %vm289, %v675
        $region44: #{tpu_custom_call.1} parent=31 // pred_fallthru
          _
        // Predicated region
        $region45: #{tpu_custom_call.1} parent=31 // pred_check
          %p677 = pneg %p118
        $region46: #{tpu_custom_call.1} parent=31 // pred_check_branch
          %679 = sbr.rel (%p677) target = $region48
        $region47: #{tpu_custom_call.1} parent=31 // pred_region
          %s681 = ssub.s32 32, 32
          %682 = vsyncadd [#allocation6], %s681
          %s683 = smul.addr %s22, 32
          %s684 = scalar_lea.hbm %s3, %s683
          %s686 = sshll.u32 [#allocation7], 4
          %s687 = int_to_ptr.vmem [resolvable:$true] %s686
          %689 = dma.vmem_to_hbm [thread:$0]  %s687, 32, %s684, [#allocation6]
        $region48: #{tpu_custom_call.1} parent=31 // pred_fallthru
          _
        // Predicated region
        $region49: #{tpu_custom_call.1} parent=31 // pred_check
          %p690 = pneg %p118
        $region50: #{tpu_custom_call.1} parent=31 // pred_check_branch
          %692 = sbr.rel (%p690) target = $region52
        $region51: #{tpu_custom_call.1} parent=31 // pred_region
          %693 = dma.done [#allocation6], 32
        $region52: #{tpu_custom_call.1} parent=31 // pred_fallthru
          _
      $region32: #{tpu_custom_call.1} parent=5 // pred_fallthru
        _
      %p694 = scmp.le.s32.totalorder 2, %s13
      // Predicated region
      $region53: #{tpu_custom_call.1} parent=5 // pred_check
        %p695 = pneg %p694
      $region54: #{tpu_custom_call.1} parent=5 // pred_check_branch
        %697 = sbr.rel (%p695) target = $region56
      $region55: #{tpu_custom_call.1} parent=5 // pred_region
        %s698 = ssub.s32 %s13, 2
      $region56: #{tpu_custom_call.1} parent=5 // pred_fallthru
        _
    $region6: #{tpu_custom_call.1} parent=1 // loop_footer
      %s17 = sadd.s32 1, %s13
    $region7: #{tpu_custom_call.1} parent=1 // loop_footer_branch
      %12 = sbr.rel target = $region3
    $region8: #{tpu_custom_call.1} parent=1 // loop_exit
      _
    %699 = vsyncpa [#allocation5], 1
    %s700 = scalar_lea.sflag [#allocation5], 1
    %701 = vsyncpa %s700, 1
    %702 = vsyncpa [#allocation6], 1
    %s703 = scalar_lea.sflag [#allocation6], 1
    %704 = vsyncpa %s703, 1

</llo_original>
